<compile_context>
chip_gen: v7x
topology: tpu7x:2x2x1
jax: 0.10.0
libtpu: 0.0.40
codegen_flags: <defaults>
</compile_context>

<pallas_src>
import jax
import jax.numpy as jnp
from jax.experimental import pallas as pl
from jax.experimental.pallas import tpu as pltpu


def _erf_f32(x):
    # Abramowitz & Stegun 7.1.26 rational approximation (|abs err| <= 1.5e-7),
    # built only from exp/mul/add/div/select so it lowers cleanly on the TPU
    # VPU/EUP (exp goes to the EUP slot, effectively free next to the MXU).
    a1, a2, a3, a4, a5 = (0.254829592, -0.284496736, 1.421413741,
                          -1.453152027, 1.061405429)
    p = 0.3275911
    ax = jnp.abs(x)
    t = 1.0 / (1.0 + p * ax)
    poly = t * (a1 + t * (a2 + t * (a3 + t * (a4 + t * a5))))
    y = 1.0 - poly * jnp.exp(-ax * ax)
    return jnp.where(x < 0, -y, y)


def _gelu_exact(x):
    # BERT's ACT2FN["gelu"]: x * 0.5 * (1 + erf(x / sqrt(2)))
    return 0.5 * x * (1.0 + _erf_f32(x * 0.7071067811865476))


def _intermediate_kernel(x_ref, w_ref, b_ref, o_ref):
    # (tile_m, H) @ (H, tile_n) on the MXU with f32 accumulation.
    y = jnp.dot(x_ref[...], w_ref[...], preferred_element_type=jnp.float32)
    y = y + b_ref[...].astype(jnp.float32)
    o_ref[...] = _gelu_exact(y).astype(o_ref.dtype)


def _round_up(x, m):
    return (x + m - 1) // m * m


def _pick_tile_n(intermediate, tile_n):
    """Largest lane-dense (multiple-of-128) divisor of I that is <= tile_n."""
    if intermediate <= tile_n:
        return intermediate
    for cand in range(tile_n, 127, -128):
        if intermediate % cand == 0:
            return cand
    return intermediate  # fall back: keep the full width resident


def bert_image_intermediate(hidden_states, params, *, tile_m=512, tile_n=2048):
    """hidden_states: (..., H) -> (..., I) with I = params['w'].shape[1]."""
    *lead, H = hidden_states.shape
    I = params["w"].shape[1]
    assert params["w"].shape[0] == H

    M = 1
    for d in lead:
        M *= d
    x2d = hidden_states.reshape(M, H)

    # Row tiles: large, pad M instead of requiring divisibility.
    tile_m = min(tile_m, _round_up(M, 8))
    Mp = _round_up(M, tile_m)
    if Mp != M:
        x2d = jnp.pad(x2d, ((0, Mp - M), (0, 0)))
    grid_m = Mp // tile_m

    # Column tiles over the intermediate dim (lane-dense).
    tile_n = _pick_tile_n(I, tile_n)
    grid_n = I // tile_n

    # VMEM budget from the actual tile footprint (double-buffered), capped at
    # 64 MiB so the limit is valid on v7x as well.
    x_sz = jnp.dtype(hidden_states.dtype).itemsize
    w_sz = jnp.dtype(params["w"].dtype).itemsize
    b_sz = jnp.dtype(params["b"].dtype).itemsize
    vmem_bytes = (2 * tile_m * H * x_sz
                  + 2 * H * tile_n * w_sz
                  + 2 * tile_n * b_sz
                  + 2 * tile_m * tile_n * x_sz) + (4 << 20)
    vmem_bytes = int(min(max(vmem_bytes, 32 << 20), 64 << 20))

    # Grid = (columns, rows): rows innermost so the weight slab's block index
    # is unchanged across row tiles (no re-DMA of W while sweeping rows).
    out2d = pl.pallas_call(
        _intermediate_kernel,
        out_shape=jax.ShapeDtypeStruct((Mp, I), hidden_states.dtype),
        grid_spec=pltpu.PrefetchScalarGridSpec(
            num_scalar_prefetch=0,
            grid=(grid_n, grid_m),
            in_specs=[
                pl.BlockSpec((tile_m, H), lambda j, i: (i, 0)),   # activations
                pl.BlockSpec((H, tile_n), lambda j, i: (0, j)),   # weight slab
                pl.BlockSpec((1, tile_n), lambda j, i: (0, j)),   # bias slab
            ],
            out_specs=pl.BlockSpec((tile_m, tile_n), lambda j, i: (i, j)),
        ),
        compiler_params=pltpu.CompilerParams(
            dimension_semantics=("parallel", "parallel"),
            vmem_limit_bytes=vmem_bytes,
        ),
    )(x2d, params["w"], params["b"])

    if Mp != M:
        out2d = out2d[:M]
    return out2d.reshape(*lead, I)


def reference_forward(hidden_states, params):
    y = (hidden_states.astype(jnp.float32) @ params["w"].astype(jnp.float32)
         + params["b"].astype(jnp.float32))
    return 0.5 * y * (1.0 + jax.scipy.special.erf(y / jnp.sqrt(2.0)))


if __name__ == "__main__":
    # Small, lane-aligned config implied by the module:
    #   v_hidden_size = 128, v_intermediate_size = 512, batch = 2, seq = 8
    B, S, H, I = 2, 8, 128, 512

    key = jax.random.PRNGKey(0)
    k_x, k_w, k_b = jax.random.split(key, 3)

    hidden_states = jax.random.normal(k_x, (B, S, H), dtype=jnp.float32)
    params = {
        # nn.Linear weight (out, in) stored pre-transposed as (in, out).
        "w": 0.02 * jax.random.normal(k_w, (H, I), dtype=jnp.float32),
        "b": 0.01 * jax.random.normal(k_b, (1, I), dtype=jnp.float32),
    }

    out = bert_image_intermediate(hidden_states, params)
    out = jax.block_until_ready(out)

    ref = reference_forward(hidden_states.reshape(-1, H), params).reshape(B, S, I)
    assert out.shape == (B, S, I)
    assert jnp.allclose(out, ref, atol=1e-4, rtol=1e-4), "mismatch vs reference"

    print("KERNEL_OK")
</pallas_src>

<mosaic_0001>
module attributes {stable_mosaic.version = 11 : i64} {
  func.func @_intermediate_kernel(%arg0: i32, %arg1: i32, %arg2: memref<16x128xf32, #tpu.memory_space<vmem>>, %arg3: memref<128x512xf32, #tpu.memory_space<vmem>>, %arg4: memref<1x512xf32, #tpu.memory_space<vmem>>, %arg5: memref<16x512xf32, #tpu.memory_space<vmem>>) attributes {dimension_semantics = [#tpu.dimension_semantics<parallel>, #tpu.dimension_semantics<parallel>], iteration_bounds = array<i64: 1, 1>, scalar_prefetch = 0 : i64, scratch_operands = 0 : i64, tpu.core_type = #tpu.core_type<tc>, window_params = [{transform_indices = @transform_0, window_bounds = array<i64: 16, 128>}, {transform_indices = @transform_1, window_bounds = array<i64: 128, 512>}, {transform_indices = @transform_2, window_bounds = array<i64: 1, 512>}, {transform_indices = @transform_3, window_bounds = array<i64: 16, 512>}]} {
    %c0 = arith.constant 0 : index
    %c0_0 = arith.constant 0 : index
    %0 = vector.load %arg2[%c0, %c0_0] : memref<16x128xf32, #tpu.memory_space<vmem>>, vector<16x128xf32>
    %c0_1 = arith.constant 0 : index
    %c0_2 = arith.constant 0 : index
    %1 = vector.load %arg3[%c0_1, %c0_2] : memref<128x512xf32, #tpu.memory_space<vmem>>, vector<128x512xf32>
    %cst = arith.constant dense<0.000000e+00> : vector<16x512xf32>
    %2 = tpu.matmul %0, %1, %cst {dimension_numbers = #tpu.dot_dimension_numbers<[1], [0], [0], [1], [0, 0, 1, 1], [], []>} : vector<16x128xf32>, vector<128x512xf32>, vector<16x512xf32> -> vector<16x512xf32>
    %c0_3 = arith.constant 0 : index
    %c0_4 = arith.constant 0 : index
    %3 = vector.load %arg4[%c0_3, %c0_4] : memref<1x512xf32, #tpu.memory_space<vmem>>, vector<1x512xf32>
    %4 = vector.broadcast %3 : vector<1x512xf32> to vector<16x512xf32>
    %5 = arith.addf %2, %4 : vector<16x512xf32>
    %cst_5 = arith.constant 5.000000e-01 : f32
    %6 = vector.broadcast %cst_5 : f32 to vector<16x512xf32>
    %7 = arith.mulf %6, %5 : vector<16x512xf32>
    %cst_6 = arith.constant 0.707106769 : f32
    %8 = vector.broadcast %cst_6 : f32 to vector<16x512xf32>
    %9 = arith.mulf %5, %8 : vector<16x512xf32>
    %10 = math.absf %9 : vector<16x512xf32>
    %cst_7 = arith.constant 0.327591091 : f32
    %11 = vector.broadcast %cst_7 : f32 to vector<16x512xf32>
    %12 = arith.mulf %11, %10 : vector<16x512xf32>
    %cst_8 = arith.constant 1.000000e+00 : f32
    %13 = vector.broadcast %cst_8 : f32 to vector<16x512xf32>
    %14 = arith.addf %13, %12 : vector<16x512xf32>
    %cst_9 = arith.constant 1.000000e+00 : f32
    %15 = vector.broadcast %cst_9 : f32 to vector<16x512xf32>
    %16 = arith.divf %15, %14 : vector<16x512xf32>
    %cst_10 = arith.constant 1.06140542 : f32
    %17 = vector.broadcast %cst_10 : f32 to vector<16x512xf32>
    %18 = arith.mulf %16, %17 : vector<16x512xf32>
    %cst_11 = arith.constant -1.45315206 : f32
    %19 = vector.broadcast %cst_11 : f32 to vector<16x512xf32>
    %20 = arith.addf %19, %18 : vector<16x512xf32>
    %21 = arith.mulf %16, %20 : vector<16x512xf32>
    %cst_12 = arith.constant 1.42141378 : f32
    %22 = vector.broadcast %cst_12 : f32 to vector<16x512xf32>
    %23 = arith.addf %22, %21 : vector<16x512xf32>
    %24 = arith.mulf %16, %23 : vector<16x512xf32>
    %cst_13 = arith.constant -0.284496725 : f32
    %25 = vector.broadcast %cst_13 : f32 to vector<16x512xf32>
    %26 = arith.addf %25, %24 : vector<16x512xf32>
    %27 = arith.mulf %16, %26 : vector<16x512xf32>
    %cst_14 = arith.constant 0.254829586 : f32
    %28 = vector.broadcast %cst_14 : f32 to vector<16x512xf32>
    %29 = arith.addf %28, %27 : vector<16x512xf32>
    %30 = arith.mulf %16, %29 : vector<16x512xf32>
    %cst_15 = arith.constant 0.000000e+00 : f32
    %31 = vector.broadcast %cst_15 : f32 to vector<16x512xf32>
    %32 = arith.subf %31, %10 : vector<16x512xf32>
    %33 = arith.mulf %32, %10 : vector<16x512xf32>
    %34 = math.exp %33 : vector<16x512xf32>
    %35 = arith.mulf %30, %34 : vector<16x512xf32>
    %cst_16 = arith.constant 1.000000e+00 : f32
    %36 = vector.broadcast %cst_16 : f32 to vector<16x512xf32>
    %37 = arith.subf %36, %35 : vector<16x512xf32>
    %cst_17 = arith.constant 0.000000e+00 : f32
    %38 = vector.broadcast %cst_17 : f32 to vector<16x512xf32>
    %39 = arith.cmpf olt, %9, %38 : vector<16x512xf32>
    %cst_18 = arith.constant 0.000000e+00 : f32
    %40 = vector.broadcast %cst_18 : f32 to vector<16x512xf32>
    %41 = arith.subf %40, %37 : vector<16x512xf32>
    %42 = arith.select %39, %41, %37 : vector<16x512xi1>, vector<16x512xf32>
    %cst_19 = arith.constant 1.000000e+00 : f32
    %43 = vector.broadcast %cst_19 : f32 to vector<16x512xf32>
    %44 = arith.addf %43, %42 : vector<16x512xf32>
    %45 = arith.mulf %7, %44 : vector<16x512xf32>
    %c0_20 = arith.constant 0 : index
    %c0_21 = arith.constant 0 : index
    %46 = vector.load %arg5[%c0_20, %c0_21] : memref<16x512xf32, #tpu.memory_space<vmem>>, vector<16x512xf32>
    tpu.vector_store %arg5[%c0_20, %c0_21], %45 {strides = array<i32>} : memref<16x512xf32, #tpu.memory_space<vmem>>, vector<16x512xf32>,
    return
  }
  func.func @transform_0(%arg0: i32, %arg1: i32) -> (i32, i32) {
    %c0_i32 = arith.constant 0 : i32
    %c0_i32_0 = arith.constant 0 : i32
    return %arg1, %c0_i32 : i32, i32
  }
  func.func @transform_1(%arg0: i32, %arg1: i32) -> (i32, i32) {
    %c0_i32 = arith.constant 0 : i32
    %c0_i32_0 = arith.constant 0 : i32
    return %c0_i32, %arg0 : i32, i32
  }
  func.func @transform_2(%arg0: i32, %arg1: i32) -> (i32, i32) {
    %c0_i32 = arith.constant 0 : i32
    %c0_i32_0 = arith.constant 0 : i32
    return %c0_i32, %arg0 : i32, i32
  }
  func.func @transform_3(%arg0: i32, %arg1: i32) -> (i32, i32) {
    %c0_i32 = arith.constant 0 : i32
    return %arg1, %arg0 : i32, i32
  }
}

</mosaic_0001>

<llo_original>
// kernel: tpu_custom_call.1
$region0: #{tpu_custom_call.1}
  #allocation0 [shape = 'u32[]', space=smem, size = 0x4, offset = 0x4, fixed_abs, tag = 'smem constant byte address 0x4 - core index']
  #allocation1 [shape = 'u32[144,128]{1,0:T(1,128)}', space=vmem, size = 0x12000, scoped, tag = 'internal scratch']
  %s0 = inlined_call_operand.hbm [shape: f32[16,128], index: 0, kind: input, shape index: {}]
  %s1 = inlined_call_operand.hbm [shape: f32[128,512], index: 1, kind: input, shape index: {}]
  %s2 = inlined_call_operand.vmem [shape: f32[1,512], index: 2, kind: input, shape index: {}]
  %s3 = inlined_call_operand.hbm [shape: f32[16,512], index: 3, kind: output, shape index: {}]
  %s4 = sld [smem:[#allocation0]]
  $region30: #{tpu_custom_call.1} parent=0
    _
  %s6 = ssub.s32 1, %s4
  %s7 = scalar_select 0, %s6, %s4
  $region1: #{tpu_custom_call.1} parent=0
    #allocation2 [shape = 'u8[8192]{0}', space=vmem, size = 0x2000, scoped, tag = 'input window, operand 0, single buffered']
    #allocation3 [shape = 's32[1]{0}', space=sflag, size = 0x4, scoped, tag = 'scoped memory for tpu_custom_call.1']
    #allocation4 [shape = 's32[1]{0}', space=sflag, size = 0x4, scoped, tag = 'scoped memory for tpu_custom_call.1']
    #allocation5 [shape = 'u8[262144]{0}', space=vmem, size = 0x40000, scoped, tag = 'input window, operand 1, single buffered']
    #allocation6 [shape = 's32[1]{0}', space=sflag, size = 0x4, scoped, tag = 'scoped memory for tpu_custom_call.1']
    #allocation7 [shape = 'u8[32768]{0}', space=vmem, size = 0x8000, scoped, tag = 'output window, operand 0, single buffered']
    %8 = vsyncpa [#allocation3], 0
    %9 = vsyncpa [#allocation6], 0
    %10 = vsyncpa [#allocation4], 0
    // Predicated region
    $region2: #{tpu_custom_call.1} parent=1 // pred_check
      _
    $region3: #{tpu_custom_call.1} parent=1 // pred_check_branch
      %12 = sbr.rel (0) target = $region5
    $region4: #{tpu_custom_call.1} parent=1 // pred_region
      %s14 = ssub.s32 256, 256
      %15 = vsyncadd [#allocation3], %s14
      %s16 = sshll.u32 [#allocation2], 4
      %s17 = int_to_ptr.vmem [resolvable:$true] %s16
      %22 = dma.hbm_to_vmem [thread:$0]  %s0, 256, %s17, [#allocation3], 128, 128, 8
    $region5: #{tpu_custom_call.1} parent=1 // pred_fallthru
      _
    // Predicated region
    $region6: #{tpu_custom_call.1} parent=1 // pred_check
      _
    $region7: #{tpu_custom_call.1} parent=1 // pred_check_branch
      %24 = sbr.rel (0) target = $region9
    $region8: #{tpu_custom_call.1} parent=1 // pred_region
      %s26 = ssub.s32 8192, 8192
      %27 = vsyncadd [#allocation6], %s26
      %s28 = sshll.u32 [#allocation5], 4
      %s29 = int_to_ptr.vmem [resolvable:$true] %s28
      %34 = dma.hbm_to_vmem [thread:$0]  %s1, 8192, %s29, [#allocation6], 512, 512, 32
    $region9: #{tpu_custom_call.1} parent=1 // pred_fallthru
      _
    // Predicated region
    $region10: #{tpu_custom_call.1} parent=1 // pred_check
      _
    $region11: #{tpu_custom_call.1} parent=1 // pred_check_branch
      %36 = sbr.rel (0) target = $region13
    $region12: #{tpu_custom_call.1} parent=1 // pred_region
      _
    $region13: #{tpu_custom_call.1} parent=1 // pred_fallthru
      _
    // Predicated region
    $region14: #{tpu_custom_call.1} parent=1 // pred_check
      _
    $region15: #{tpu_custom_call.1} parent=1 // pred_check_branch
      %38 = sbr.rel (0) target = $region17
    $region16: #{tpu_custom_call.1} parent=1 // pred_region
      %39 = dma.done [#allocation3], 256
    $region17: #{tpu_custom_call.1} parent=1 // pred_fallthru
      _
    // Predicated region
    $region18: #{tpu_custom_call.1} parent=1 // pred_check
      _
    $region19: #{tpu_custom_call.1} parent=1 // pred_check_branch
      %41 = sbr.rel (0) target = $region21
    $region20: #{tpu_custom_call.1} parent=1 // pred_region
      %42 = dma.done [#allocation6], 8192
    $region21: #{tpu_custom_call.1} parent=1 // pred_fallthru
      _
    %v43 = vld [vmem:[#allocation2] sm:$0xff]
    %v44 = vld [vmem:[#allocation2 + $0x8] sm:$0xff]
    %v45 = vld [vmem:[#allocation5] sm:$0xff]
    %v46 = vld [vmem:[#allocation5 + $0x8] sm:$0xff]
    %v47 = vld [vmem:[#allocation5 + $0x10] sm:$0xff]
    %v48 = vld [vmem:[#allocation5 + $0x18] sm:$0xff]
    %v49 = vld [vmem:[#allocation5 + $0x20] sm:$0xff]
    %v50 = vld [vmem:[#allocation5 + $0x28] sm:$0xff]
    %v51 = vld [vmem:[#allocation5 + $0x30] sm:$0xff]
    %v52 = vld [vmem:[#allocation5 + $0x38] sm:$0xff]
    %v53 = vld [vmem:[#allocation5 + $0x40] sm:$0xff]
    %v54 = vld [vmem:[#allocation5 + $0x48] sm:$0xff]
    %v55 = vld [vmem:[#allocation5 + $0x50] sm:$0xff]
    %v56 = vld [vmem:[#allocation5 + $0x58] sm:$0xff]
    %v57 = vld [vmem:[#allocation5 + $0x60] sm:$0xff]
    %v58 = vld [vmem:[#allocation5 + $0x68] sm:$0xff]
    %v59 = vld [vmem:[#allocation5 + $0x70] sm:$0xff]
    %v60 = vld [vmem:[#allocation5 + $0x78] sm:$0xff]
    %v61 = vld [vmem:[#allocation5 + $0x80] sm:$0xff]
    %v62 = vld [vmem:[#allocation5 + $0x88] sm:$0xff]
    %v63 = vld [vmem:[#allocation5 + $0x90] sm:$0xff]
    %v64 = vld [vmem:[#allocation5 + $0x98] sm:$0xff]
    %v65 = vld [vmem:[#allocation5 + $0xa0] sm:$0xff]
    %v66 = vld [vmem:[#allocation5 + $0xa8] sm:$0xff]
    %v67 = vld [vmem:[#allocation5 + $0xb0] sm:$0xff]
    %v68 = vld [vmem:[#allocation5 + $0xb8] sm:$0xff]
    %v69 = vld [vmem:[#allocation5 + $0xc0] sm:$0xff]
    %v70 = vld [vmem:[#allocation5 + $0xc8] sm:$0xff]
    %v71 = vld [vmem:[#allocation5 + $0xd0] sm:$0xff]
    %v72 = vld [vmem:[#allocation5 + $0xd8] sm:$0xff]
    %v73 = vld [vmem:[#allocation5 + $0xe0] sm:$0xff]
    %v74 = vld [vmem:[#allocation5 + $0xe8] sm:$0xff]
    %v75 = vld [vmem:[#allocation5 + $0xf0] sm:$0xff]
    %v76 = vld [vmem:[#allocation5 + $0xf8] sm:$0xff]
    %v77 = vld [vmem:[#allocation5 + $0x100] sm:$0xff]
    %v78 = vld [vmem:[#allocation5 + $0x108] sm:$0xff]
    %v79 = vld [vmem:[#allocation5 + $0x110] sm:$0xff]
    %v80 = vld [vmem:[#allocation5 + $0x118] sm:$0xff]
    %v81 = vld [vmem:[#allocation5 + $0x120] sm:$0xff]
    %v82 = vld [vmem:[#allocation5 + $0x128] sm:$0xff]
    %v83 = vld [vmem:[#allocation5 + $0x130] sm:$0xff]
    %v84 = vld [vmem:[#allocation5 + $0x138] sm:$0xff]
    %v85 = vld [vmem:[#allocation5 + $0x140] sm:$0xff]
    %v86 = vld [vmem:[#allocation5 + $0x148] sm:$0xff]
    %v87 = vld [vmem:[#allocation5 + $0x150] sm:$0xff]
    %v88 = vld [vmem:[#allocation5 + $0x158] sm:$0xff]
    %v89 = vld [vmem:[#allocation5 + $0x160] sm:$0xff]
    %v90 = vld [vmem:[#allocation5 + $0x168] sm:$0xff]
    %v91 = vld [vmem:[#allocation5 + $0x170] sm:$0xff]
    %v92 = vld [vmem:[#allocation5 + $0x178] sm:$0xff]
    %v93 = vld [vmem:[#allocation5 + $0x180] sm:$0xff]
    %v94 = vld [vmem:[#allocation5 + $0x188] sm:$0xff]
    %v95 = vld [vmem:[#allocation5 + $0x190] sm:$0xff]
    %v96 = vld [vmem:[#allocation5 + $0x198] sm:$0xff]
    %v97 = vld [vmem:[#allocation5 + $0x1a0] sm:$0xff]
    %v98 = vld [vmem:[#allocation5 + $0x1a8] sm:$0xff]
    %v99 = vld [vmem:[#allocation5 + $0x1b0] sm:$0xff]
    %v100 = vld [vmem:[#allocation5 + $0x1b8] sm:$0xff]
    %v101 = vld [vmem:[#allocation5 + $0x1c0] sm:$0xff]
    %v102 = vld [vmem:[#allocation5 + $0x1c8] sm:$0xff]
    %v103 = vld [vmem:[#allocation5 + $0x1d0] sm:$0xff]
    %v104 = vld [vmem:[#allocation5 + $0x1d8] sm:$0xff]
    %v105 = vld [vmem:[#allocation5 + $0x1e0] sm:$0xff]
    %v106 = vld [vmem:[#allocation5 + $0x1e8] sm:$0xff]
    %v107 = vld [vmem:[#allocation5 + $0x1f0] sm:$0xff]
    %v108 = vld [vmem:[#allocation5 + $0x1f8] sm:$0xff]
    %v109 = vld [vmem:[%s2] sm:$0xf]
    %v111 = vlaneseq
    %v112 = vshrl.u32 %v111, 7
    %v113 = vsub.s32 0, %v112
    %v114 = vrot.slane %v109, %v113
    %v115 = vlaneseq
    %v116 = vshrl.u32 %v115, 7
    %v117 = vsub.s32 1, %v116
    %v118 = vrot.slane %v109, %v117
    %v119 = vlaneseq
    %v120 = vshrl.u32 %v119, 7
    %v121 = vsub.s32 2, %v120
    %v122 = vrot.slane %v109, %v121
    %v123 = vlaneseq
    %v124 = vshrl.u32 %v123, 7
    %v125 = vsub.s32 3, %v124
    %v126 = vrot.slane %v109, %v125
    %131 = vmatprep.subr.mxu0 %v46
    %132 = vmatpush1.msra.mxu0 %v45
    %133 = vmatprep.subr.mxu0 %v50
    %134 = vmatpush1.msra.mxu0 %v49
    %135 = vmatprep.subr.mxu0 %v54
    %136 = vmatpush1.msra.mxu0 %v53
    %137 = vmatprep.subr.mxu0 %v58
    %138 = vmatpush1.msra.mxu0 %v57
    %139 = vmatprep.subr.mxu0 %v62
    %140 = vmatpush1.msra.mxu0 %v61
    %141 = vmatprep.subr.mxu0 %v66
    %142 = vmatpush1.msra.mxu0 %v65
    %143 = vmatprep.subr.mxu0 %v70
    %144 = vmatpush1.msra.mxu0 %v69
    %145 = vmatprep.subr.mxu0 %v74
    %146 = vmatpush1.msra.mxu0 %v73
    %147 = vmatprep.subr.mxu0 %v78
    %148 = vmatpush1.msra.mxu0 %v77
    %149 = vmatprep.subr.mxu0 %v82
    %150 = vmatpush1.msra.mxu0 %v81
    %151 = vmatprep.subr.mxu0 %v86
    %152 = vmatpush1.msra.mxu0 %v85
    %153 = vmatprep.subr.mxu0 %v90
    %154 = vmatpush1.msra.mxu0 %v89
    %155 = vmatprep.subr.mxu0 %v94
    %156 = vmatpush1.msra.mxu0 %v93
    %157 = vmatprep.subr.mxu0 %v98
    %158 = vmatpush1.msra.mxu0 %v97
    %159 = vmatprep.subr.mxu0 %v102
    %160 = vmatpush1.msra.mxu0 %v101
    %161 = vmatprep.subr.mxu0 %v106
    %162 = vmatpush1.msra.mxu0 %v105
    %163 = vmatprep.subr.mxu0 0.0
    %164 = vmatpush1.msra.mxu0 0.0
    %165 = vmatprep.subr.mxu0 0.0
    %166 = vmatpush1.msra.mxu0 0.0
    %167 = vmatprep.subr.mxu0 0.0
    %168 = vmatpush1.msra.mxu0 0.0
    %169 = vmatprep.subr.mxu0 0.0
    %170 = vmatpush1.msra.mxu0 0.0
    %171 = vmatprep.subr.mxu0 0.0
    %172 = vmatpush1.msra.mxu0 0.0
    %173 = vmatprep.subr.mxu0 0.0
    %174 = vmatpush1.msra.mxu0 0.0
    %175 = vmatprep.subr.mxu0 0.0
    %176 = vmatpush1.msra.mxu0 0.0
    %177 = vmatprep.subr.mxu0 0.0
    %178 = vmatpush1.msra.mxu0 0.0
    %179 = vmatprep.subr.mxu0 0.0
    %180 = vmatpush1.msra.mxu0 0.0
    %181 = vmatprep.subr.mxu0 0.0
    %182 = vmatpush1.msra.mxu0 0.0
    %183 = vmatprep.subr.mxu0 0.0
    %184 = vmatpush1.msra.mxu0 0.0
    %185 = vmatprep.subr.mxu0 0.0
    %186 = vmatpush1.msra.mxu0 0.0
    %187 = vmatprep.subr.mxu0 0.0
    %188 = vmatpush1.msra.mxu0 0.0
    %189 = vmatprep.subr.mxu0 0.0
    %190 = vmatpush1.msra.mxu0 0.0
    %191 = vmatprep.subr.mxu0 0.0
    %192 = vmatpush1.msra.mxu0 0.0
    %193 = vmatprep.subr.mxu0 0.0
    %194 = vmatpush1.msra.mxu0 0.0
    %195 = vmatprep.mubr.f32.mxu0 0.0
    %196 = vmatmul.mubr.f32.gmra.mrb[0].mxu0 %v43
    %v197 = vpop.f32.mrb[0].mxu0
    %v198 = vadd.f32 %v114, %v197
    %v199 = vpop.f32.mrb[0].mxu0
    %v200 = vadd.f32 %v118, %v199
    %201 = vmatprep.mubr.f32.mxu0 0.0
    %202 = vmatmul.mubr.f32.gmra.mrb[0].mxu0 %v44
    %v203 = vpop.f32.mrb[0].mxu0
    %v204 = vadd.f32 %v114, %v203
    %v205 = vpop.f32.mrb[0].mxu0
    %v206 = vadd.f32 %v118, %v205
    %207 = vdwg.mxu0
    %208 = vmatprep.subr.mxu0 %v48
    %209 = vmatpush1.msra.mxu0 %v47
    %210 = vmatprep.subr.mxu0 %v52
    %211 = vmatpush1.msra.mxu0 %v51
    %212 = vmatprep.subr.mxu0 %v56
    %213 = vmatpush1.msra.mxu0 %v55
    %214 = vmatprep.subr.mxu0 %v60
    %215 = vmatpush1.msra.mxu0 %v59
    %216 = vmatprep.subr.mxu0 %v64
    %217 = vmatpush1.msra.mxu0 %v63
    %218 = vmatprep.subr.mxu0 %v68
    %219 = vmatpush1.msra.mxu0 %v67
    %220 = vmatprep.subr.mxu0 %v72
    %221 = vmatpush1.msra.mxu0 %v71
    %222 = vmatprep.subr.mxu0 %v76
    %223 = vmatpush1.msra.mxu0 %v75
    %224 = vmatprep.subr.mxu0 %v80
    %225 = vmatpush1.msra.mxu0 %v79
    %226 = vmatprep.subr.mxu0 %v84
    %227 = vmatpush1.msra.mxu0 %v83
    %228 = vmatprep.subr.mxu0 %v88
    %229 = vmatpush1.msra.mxu0 %v87
    %230 = vmatprep.subr.mxu0 %v92
    %231 = vmatpush1.msra.mxu0 %v91
    %232 = vmatprep.subr.mxu0 %v96
    %233 = vmatpush1.msra.mxu0 %v95
    %234 = vmatprep.subr.mxu0 %v100
    %235 = vmatpush1.msra.mxu0 %v99
    %236 = vmatprep.subr.mxu0 %v104
    %237 = vmatpush1.msra.mxu0 %v103
    %238 = vmatprep.subr.mxu0 %v108
    %239 = vmatpush1.msra.mxu0 %v107
    %240 = vmatprep.subr.mxu0 0.0
    %241 = vmatpush1.msra.mxu0 0.0
    %242 = vmatprep.subr.mxu0 0.0
    %243 = vmatpush1.msra.mxu0 0.0
    %244 = vmatprep.subr.mxu0 0.0
    %245 = vmatpush1.msra.mxu0 0.0
    %246 = vmatprep.subr.mxu0 0.0
    %247 = vmatpush1.msra.mxu0 0.0
    %248 = vmatprep.subr.mxu0 0.0
    %249 = vmatpush1.msra.mxu0 0.0
    %250 = vmatprep.subr.mxu0 0.0
    %251 = vmatpush1.msra.mxu0 0.0
    %252 = vmatprep.subr.mxu0 0.0
    %253 = vmatpush1.msra.mxu0 0.0
    %254 = vmatprep.subr.mxu0 0.0
    %255 = vmatpush1.msra.mxu0 0.0
    %256 = vmatprep.subr.mxu0 0.0
    %257 = vmatpush1.msra.mxu0 0.0
    %258 = vmatprep.subr.mxu0 0.0
    %259 = vmatpush1.msra.mxu0 0.0
    %260 = vmatprep.subr.mxu0 0.0
    %261 = vmatpush1.msra.mxu0 0.0
    %262 = vmatprep.subr.mxu0 0.0
    %263 = vmatpush1.msra.mxu0 0.0
    %264 = vmatprep.subr.mxu0 0.0
    %265 = vmatpush1.msra.mxu0 0.0
    %266 = vmatprep.subr.mxu0 0.0
    %267 = vmatpush1.msra.mxu0 0.0
    %268 = vmatprep.subr.mxu0 0.0
    %269 = vmatpush1.msra.mxu0 0.0
    %270 = vmatprep.subr.mxu0 0.0
    %271 = vmatpush1.msra.mxu0 0.0
    %272 = vmatprep.mubr.f32.mxu0 0.0
    %273 = vmatmul.mubr.f32.gmra.mrb[0].mxu0 %v43
    %v274 = vpop.f32.mrb[0].mxu0
    %v275 = vadd.f32 %v122, %v274
    %v276 = vpop.f32.mrb[0].mxu0
    %v277 = vadd.f32 %v126, %v276
    %278 = vmatprep.mubr.f32.mxu0 0.0
    %279 = vmatmul.mubr.f32.gmra.mrb[0].mxu0 %v44
    %v280 = vpop.f32.mrb[0].mxu0
    %v281 = vadd.f32 %v122, %v280
    %v282 = vpop.f32.mrb[0].mxu0
    %v283 = vadd.f32 %v126, %v282
    %284 = vdwg.mxu0
    %v285 = vmul.f32 %v198, 0.5
    %v286 = vmul.f32 %v200, 0.5
    %v287 = vmul.f32 %v275, 0.5
    %v288 = vmul.f32 %v277, 0.5
    %v289 = vmul.f32 %v204, 0.5
    %v290 = vmul.f32 %v206, 0.5
    %v291 = vmul.f32 %v281, 0.5
    %v292 = vmul.f32 %v283, 0.5
    %v293 = vmul.f32 %v198, 0.70710677
    %v294 = vmul.f32 %v200, 0.70710677
    %v295 = vmul.f32 %v275, 0.70710677
    %v296 = vmul.f32 %v277, 0.70710677
    %v297 = vmul.f32 %v204, 0.70710677
    %v298 = vmul.f32 %v206, 0.70710677
    %v299 = vmul.f32 %v281, 0.70710677
    %v300 = vmul.f32 %v283, 0.70710677
    %v301 = vand.u32 2147483647, %v293
    %v302 = vand.u32 2147483647, %v294
    %v303 = vand.u32 2147483647, %v295
    %v304 = vand.u32 2147483647, %v296
    %v305 = vand.u32 2147483647, %v297
    %v306 = vand.u32 2147483647, %v298
    %v307 = vand.u32 2147483647, %v299
    %v308 = vand.u32 2147483647, %v300
    %v309 = vmul.f32 %v301, 0.3275911
    %v310 = vmul.f32 %v302, 0.3275911
    %v311 = vmul.f32 %v303, 0.3275911
    %v312 = vmul.f32 %v304, 0.3275911
    %v313 = vmul.f32 %v305, 0.3275911
    %v314 = vmul.f32 %v306, 0.3275911
    %v315 = vmul.f32 %v307, 0.3275911
    %v316 = vmul.f32 %v308, 0.3275911
    %v317 = vadd.f32 %v309, 1.0
    %v318 = vadd.f32 %v310, 1.0
    %v319 = vadd.f32 %v311, 1.0
    %v320 = vadd.f32 %v312, 1.0
    %v321 = vadd.f32 %v313, 1.0
    %v322 = vadd.f32 %v314, 1.0
    %v323 = vadd.f32 %v315, 1.0
    %v324 = vadd.f32 %v316, 1.0
    %v325 = vrcp.pop %v317
    %v326 = vmul.f32 1.0, %v325
    %v327 = vrcp.pop %v318
    %v328 = vmul.f32 1.0, %v327
    %v329 = vrcp.pop %v319
    %v330 = vmul.f32 1.0, %v329
    %v331 = vrcp.pop %v320
    %v332 = vmul.f32 1.0, %v331
    %v333 = vrcp.pop %v321
    %v334 = vmul.f32 1.0, %v333
    %v335 = vrcp.pop %v322
    %v336 = vmul.f32 1.0, %v335
    %v337 = vrcp.pop %v323
    %v338 = vmul.f32 1.0, %v337
    %v339 = vrcp.pop %v324
    %v340 = vmul.f32 1.0, %v339
    %v341 = vmul.f32 %v326, 1.0614054
    %v342 = vmul.f32 %v328, 1.0614054
    %v343 = vmul.f32 %v330, 1.0614054
    %v344 = vmul.f32 %v332, 1.0614054
    %v345 = vmul.f32 %v334, 1.0614054
    %v346 = vmul.f32 %v336, 1.0614054
    %v347 = vmul.f32 %v338, 1.0614054
    %v348 = vmul.f32 %v340, 1.0614054
    %v349 = vadd.f32 %v341, -1.4531521
    %v350 = vadd.f32 %v342, -1.4531521
    %v351 = vadd.f32 %v343, -1.4531521
    %v352 = vadd.f32 %v344, -1.4531521
    %v353 = vadd.f32 %v345, -1.4531521
    %v354 = vadd.f32 %v346, -1.4531521
    %v355 = vadd.f32 %v347, -1.4531521
    %v356 = vadd.f32 %v348, -1.4531521
    %v357 = vmul.f32 %v326, %v349
    %v358 = vmul.f32 %v328, %v350
    %v359 = vmul.f32 %v330, %v351
    %v360 = vmul.f32 %v332, %v352
    %v361 = vmul.f32 %v334, %v353
    %v362 = vmul.f32 %v336, %v354
    %v363 = vmul.f32 %v338, %v355
    %v364 = vmul.f32 %v340, %v356
    %v365 = vadd.f32 %v357, 1.4214138
    %v366 = vadd.f32 %v358, 1.4214138
    %v367 = vadd.f32 %v359, 1.4214138
    %v368 = vadd.f32 %v360, 1.4214138
    %v369 = vadd.f32 %v361, 1.4214138
    %v370 = vadd.f32 %v362, 1.4214138
    %v371 = vadd.f32 %v363, 1.4214138
    %v372 = vadd.f32 %v364, 1.4214138
    %v373 = vmul.f32 %v326, %v365
    %v374 = vmul.f32 %v328, %v366
    %v375 = vmul.f32 %v330, %v367
    %v376 = vmul.f32 %v332, %v368
    %v377 = vmul.f32 %v334, %v369
    %v378 = vmul.f32 %v336, %v370
    %v379 = vmul.f32 %v338, %v371
    %v380 = vmul.f32 %v340, %v372
    %v381 = vadd.f32 %v373, -0.28449672
    %v382 = vadd.f32 %v374, -0.28449672
    %v383 = vadd.f32 %v375, -0.28449672
    %v384 = vadd.f32 %v376, -0.28449672
    %v385 = vadd.f32 %v377, -0.28449672
    %v386 = vadd.f32 %v378, -0.28449672
    %v387 = vadd.f32 %v379, -0.28449672
    %v388 = vadd.f32 %v380, -0.28449672
    %v389 = vmul.f32 %v326, %v381
    %v390 = vmul.f32 %v328, %v382
    %v391 = vmul.f32 %v330, %v383
    %v392 = vmul.f32 %v332, %v384
    %v393 = vmul.f32 %v334, %v385
    %v394 = vmul.f32 %v336, %v386
    %v395 = vmul.f32 %v338, %v387
    %v396 = vmul.f32 %v340, %v388
    %v397 = vadd.f32 %v389, 0.2548296
    %v398 = vadd.f32 %v390, 0.2548296
    %v399 = vadd.f32 %v391, 0.2548296
    %v400 = vadd.f32 %v392, 0.2548296
    %v401 = vadd.f32 %v393, 0.2548296
    %v402 = vadd.f32 %v394, 0.2548296
    %v403 = vadd.f32 %v395, 0.2548296
    %v404 = vadd.f32 %v396, 0.2548296
    %v405 = vmul.f32 %v326, %v397
    %v406 = vmul.f32 %v328, %v398
    %v407 = vmul.f32 %v330, %v399
    %v408 = vmul.f32 %v332, %v400
    %v409 = vmul.f32 %v334, %v401
    %v410 = vmul.f32 %v336, %v402
    %v411 = vmul.f32 %v338, %v403
    %v412 = vmul.f32 %v340, %v404
    %v413 = vsub.f32 0.0, %v301
    %v414 = vsub.f32 0.0, %v302
    %v415 = vsub.f32 0.0, %v303
    %v416 = vsub.f32 0.0, %v304
    %v417 = vsub.f32 0.0, %v305
    %v418 = vsub.f32 0.0, %v306
    %v419 = vsub.f32 0.0, %v307
    %v420 = vsub.f32 0.0, %v308
    %v421 = vmul.f32 %v413, %v301
    %v422 = vmul.f32 %v414, %v302
    %v423 = vmul.f32 %v415, %v303
    %v424 = vmul.f32 %v416, %v304
    %v425 = vmul.f32 %v417, %v305
    %v426 = vmul.f32 %v418, %v306
    %v427 = vmul.f32 %v419, %v307
    %v428 = vmul.f32 %v420, %v308
    %v429 = vmul.f32 %v421, 1.442695
    %v430 = vpow.pop %v429
    %v431 = vmul.f32 %v422, 1.442695
    %v432 = vpow.pop %v431
    %v433 = vmul.f32 %v423, 1.442695
    %v434 = vpow.pop %v433
    %v435 = vmul.f32 %v424, 1.442695
    %v436 = vpow.pop %v435
    %v437 = vmul.f32 %v425, 1.442695
    %v438 = vpow.pop %v437
    %v439 = vmul.f32 %v426, 1.442695
    %v440 = vpow.pop %v439
    %v441 = vmul.f32 %v427, 1.442695
    %v442 = vpow.pop %v441
    %v443 = vmul.f32 %v428, 1.442695
    %v444 = vpow.pop %v443
    %v445 = vmul.f32 %v405, %v430
    %v446 = vmul.f32 %v406, %v432
    %v447 = vmul.f32 %v407, %v434
    %v448 = vmul.f32 %v408, %v436
    %v449 = vmul.f32 %v409, %v438
    %v450 = vmul.f32 %v410, %v440
    %v451 = vmul.f32 %v411, %v442
    %v452 = vmul.f32 %v412, %v444
    %v453 = vsub.f32 1.0, %v445
    %v454 = vsub.f32 1.0, %v446
    %v455 = vsub.f32 1.0, %v447
    %v456 = vsub.f32 1.0, %v448
    %v457 = vsub.f32 1.0, %v449
    %v458 = vsub.f32 1.0, %v450
    %v459 = vsub.f32 1.0, %v451
    %v460 = vsub.f32 1.0, %v452
    %vm461 = vcmp.lt.f32.partialorder %v293, 0.0
    %vm462 = vcmp.lt.f32.partialorder %v294, 0.0
    %vm463 = vcmp.lt.f32.partialorder %v295, 0.0
    %vm464 = vcmp.lt.f32.partialorder %v296, 0.0
    %vm465 = vcmp.lt.f32.partialorder %v297, 0.0
    %vm466 = vcmp.lt.f32.partialorder %v298, 0.0
    %vm467 = vcmp.lt.f32.partialorder %v299, 0.0
    %vm468 = vcmp.lt.f32.partialorder %v300, 0.0
    %v469 = vsub.f32 0.0, %v453
    %v470 = vsub.f32 0.0, %v454
    %v471 = vsub.f32 0.0, %v455
    %v472 = vsub.f32 0.0, %v456
    %v473 = vsub.f32 0.0, %v457
    %v474 = vsub.f32 0.0, %v458
    %v475 = vsub.f32 0.0, %v459
    %v476 = vsub.f32 0.0, %v460
    %v477 = vsel %vm461, %v469, %v453
    %v478 = vsel %vm462, %v470, %v454
    %v479 = vsel %vm463, %v471, %v455
    %v480 = vsel %vm464, %v472, %v456
    %v481 = vsel %vm465, %v473, %v457
    %v482 = vsel %vm466, %v474, %v458
    %v483 = vsel %vm467, %v475, %v459
    %v484 = vsel %vm468, %v476, %v460
    %v485 = vadd.f32 %v477, 1.0
    %v486 = vadd.f32 %v478, 1.0
    %v487 = vadd.f32 %v479, 1.0
    %v488 = vadd.f32 %v480, 1.0
    %v489 = vadd.f32 %v481, 1.0
    %v490 = vadd.f32 %v482, 1.0
    %v491 = vadd.f32 %v483, 1.0
    %v492 = vadd.f32 %v484, 1.0
    %v493 = vmul.f32 %v285, %v485
    %v494 = vmul.f32 %v286, %v486
    %v495 = vmul.f32 %v287, %v487
    %v496 = vmul.f32 %v288, %v488
    %v497 = vmul.f32 %v289, %v489
    %v498 = vmul.f32 %v290, %v490
    %v499 = vmul.f32 %v291, %v491
    %v500 = vmul.f32 %v292, %v492
    %501 = vst [vmem:[#allocation7] sm:$0xff] %v493
    %502 = vst [vmem:[#allocation7 + $0x8] sm:$0xff] %v494
    %503 = vst [vmem:[#allocation7 + $0x10] sm:$0xff] %v495
    %504 = vst [vmem:[#allocation7 + $0x18] sm:$0xff] %v496
    %505 = vst [vmem:[#allocation7 + $0x20] sm:$0xff] %v497
    %506 = vst [vmem:[#allocation7 + $0x28] sm:$0xff] %v498
    %507 = vst [vmem:[#allocation7 + $0x30] sm:$0xff] %v499
    %508 = vst [vmem:[#allocation7 + $0x38] sm:$0xff] %v500
    // Predicated region
    $region22: #{tpu_custom_call.1} parent=1 // pred_check
      _
    $region23: #{tpu_custom_call.1} parent=1 // pred_check_branch
      %510 = sbr.rel (0) target = $region25
    $region24: #{tpu_custom_call.1} parent=1 // pred_region
      %s512 = ssub.s32 1024, 1024
      %513 = vsyncadd [#allocation4], %s512
      %s514 = sshll.u32 [#allocation7], 4
      %s515 = int_to_ptr.vmem [resolvable:$true] %s514
      %520 = dma.vmem_to_hbm [thread:$0]  %s515, 1024, %s3, [#allocation4], 512, 512, 32
    $region25: #{tpu_custom_call.1} parent=1 // pred_fallthru
      _
    // Predicated region
    $region26: #{tpu_custom_call.1} parent=1 // pred_check
      _
    $region27: #{tpu_custom_call.1} parent=1 // pred_check_branch
      %522 = sbr.rel (0) target = $region29
    $region28: #{tpu_custom_call.1} parent=1 // pred_region
      %523 = dma.done [#allocation4], 1024
    $region29: #{tpu_custom_call.1} parent=1 // pred_fallthru
      _
    %524 = vsyncpa [#allocation3], 1
    %525 = vsyncpa [#allocation6], 1
    %526 = vsyncpa [#allocation4], 1

</llo_original>
